<compile_context>
chip_gen: v7x
topology: tpu7x:2x2x1
jax: 0.10.0
libtpu: 0.0.40
codegen_flags: <defaults>
</compile_context>

<pallas_src>
import jax
import jax.numpy as jnp
from jax.experimental import pallas as pl
from jax.experimental.pallas import tpu as pltpu


def _srelu_cols(h, p):
    """SReLU with per-channel params as columns.

    h: (C, TB) activations (channels on sublanes, batch on lanes).
    p: (C, 5) packed [bias, t_left, a_left, t_right, a_right] per channel.
    """
    t_l = p[:, 1:2]
    a_l = p[:, 2:3]
    t_r = p[:, 3:4]
    a_r = p[:, 4:5]
    return jnp.where(
        h >= t_r,
        t_r + a_r * (h - t_r),
        jnp.where(h <= t_l, t_l + a_l * (h - t_l), h),
    )


def mlp_srelu_kernel(x_ref, w1_ref, bp1_ref, w2_ref, bp2_ref, w3b3_ref, o_ref):
    x = x_ref[...]        # (24, TB)  batch on lanes
    w1 = w1_ref[...]      # (10, 24)
    bp1 = bp1_ref[...]    # (10, 5)
    w2 = w2_ref[...]      # (4, 10)
    bp2 = bp2_ref[...]    # (4, 5)
    w3b3 = w3b3_ref[...]  # (1, 5)

    # ---- fc1 (+ bias) + SReLU(10): MXU with lane-dense N = TB ----
    h1 = jnp.dot(w1, x, preferred_element_type=jnp.float32)    # (10, TB)
    h1 = h1 + bp1[:, 0:1]
    h1 = _srelu_cols(h1, bp1)

    # ---- fc2 (+ bias) + SReLU(4): tiny K=10 -> unrolled VPU FMAs ----
    h2 = w2[:, 0:1] * h1[0:1, :] + bp2[:, 0:1]                  # (4, TB)
    for k in range(1, 10):
        h2 = h2 + w2[:, k:k + 1] * h1[k:k + 1, :]
    h2 = _srelu_cols(h2, bp2)

    # ---- fc3 (+ bias): K=4 -> unrolled VPU FMAs; lane-dense (1, TB) store ----
    out = w3b3[:, 0:1] * h2[0:1, :] + w3b3[:, 4:5]              # (1, TB)
    for k in range(1, 4):
        out = out + w3b3[:, k:k + 1] * h2[k:k + 1, :]
    o_ref[...] = out


def _round_up(n, m):
    return ((n + m - 1) // m) * m


def mlp_srelu_forward(x, params, *, tb=1024):
    """x: (B, 24) float32 -> (B, 1) float32."""
    w1, bp1, w2, bp2, w3b3 = params
    B = x.shape[0]
    tb = min(tb, _round_up(B, 128))           # lane tile, multiple of 128
    Bp = _round_up(B, tb)                     # padded batch

    # Batch on lanes: carry activations as (features, batch), zero-pad batch.
    x_t = jnp.pad(x.astype(jnp.float32).T, ((0, 0), (0, Bp - B)))  # (24, Bp)

    out_t = pl.pallas_call(
        mlp_srelu_kernel,
        out_shape=jax.ShapeDtypeStruct((1, Bp), jnp.float32),
        grid=(Bp // tb,),
        in_specs=[
            pl.BlockSpec((24, tb), lambda i: (0, i)),   # x tile (streamed)
            pl.BlockSpec((10, 24), lambda i: (0, 0)),   # w1 (VMEM-resident)
            pl.BlockSpec((10, 5), lambda i: (0, 0)),    # b1 + srelu1 params
            pl.BlockSpec((4, 10), lambda i: (0, 0)),    # w2
            pl.BlockSpec((4, 5), lambda i: (0, 0)),     # b2 + srelu2 params
            pl.BlockSpec((1, 5), lambda i: (0, 0)),     # w3 | b3
        ],
        out_specs=pl.BlockSpec((1, tb), lambda i: (0, i)),
        compiler_params=pltpu.CompilerParams(
            dimension_semantics=("parallel",)),
    )(x_t, w1, bp1, w2, bp2, w3b3)

    return out_t[:, :B].T                      # (B, 1)


def init_params(key):
    ks = jax.random.split(key, 8)

    def linear(kw, kb, fan_in, fan_out):
        # mimic PyTorch nn.Linear default: U(-1/sqrt(fan_in), 1/sqrt(fan_in))
        bound = 1.0 / jnp.sqrt(jnp.float32(fan_in))
        w = jax.random.uniform(kw, (fan_out, fan_in), jnp.float32, -bound, bound)
        b = jax.random.uniform(kb, (fan_out, 1), jnp.float32, -bound, bound)
        return w, b

    def srelu_cols(k, c):
        # columns: t_left (zeros), a_left U[0,1), t_right U[0,5), a_right ones
        k1, k2 = jax.random.split(k)
        t_l = jnp.zeros((c, 1), jnp.float32)
        a_l = jax.random.uniform(k1, (c, 1), jnp.float32, 0.0, 1.0)
        t_r = jax.random.uniform(k2, (c, 1), jnp.float32, 0.0, 5.0)
        a_r = jnp.ones((c, 1), jnp.float32)
        return jnp.concatenate([t_l, a_l, t_r, a_r], axis=1)   # (c, 4)

    w1, b1 = linear(ks[0], ks[1], 24, 10)
    w2, b2 = linear(ks[2], ks[3], 10, 4)
    w3, b3 = linear(ks[4], ks[5], 4, 1)
    p1 = srelu_cols(ks[6], 10)
    p2 = srelu_cols(ks[7], 4)

    bp1 = jnp.concatenate([b1, p1], axis=1)     # (10, 5)
    bp2 = jnp.concatenate([b2, p2], axis=1)     # (4, 5)
    w3b3 = jnp.concatenate([w3, b3], axis=1)    # (1, 5)
    return (w1, bp1, w2, bp2, w3b3)


def reference_forward(x, params):
    """Pure-JAX reference in standard (B, features) layout."""
    w1, bp1, w2, bp2, w3b3 = params

    def srelu(h, p):  # h: (B, C); p: (C, 5)
        t_l, a_l, t_r, a_r = p[:, 1], p[:, 2], p[:, 3], p[:, 4]
        return jnp.where(h >= t_r, t_r + a_r * (h - t_r),
                         jnp.where(h <= t_l, t_l + a_l * (h - t_l), h))

    h1 = srelu(x @ w1.T + bp1[:, 0], bp1)
    h2 = srelu(h1 @ w2.T + bp2[:, 0], bp2)
    return h2 @ w3b3[:, :4].T + w3b3[:, 4]


if __name__ == "__main__":
    key = jax.random.PRNGKey(0)
    kx, kx2, kp = jax.random.split(key, 3)
    params = init_params(kp)

    # Small batch (padded to one 128-wide lane tile inside the wrapper).
    x = jax.random.normal(kx, (8, 24), jnp.float32)
    out = mlp_srelu_forward(x, params)
    jax.block_until_ready(out)
    ref = reference_forward(x, params)
    assert out.shape == (8, 1)
    assert jnp.allclose(out, ref, atol=1e-4, rtol=1e-5)

    # Larger batch exercising the multi-tile "parallel" grid path (3 x 128).
    x2 = jax.random.normal(kx2, (300, 24), jnp.float32)
    out2 = mlp_srelu_forward(x2, params, tb=128)
    jax.block_until_ready(out2)
    ref2 = reference_forward(x2, params)
    assert out2.shape == (300, 1)
    assert jnp.allclose(out2, ref2, atol=1e-4, rtol=1e-5)

    print("KERNEL_OK")
</pallas_src>

<mosaic_0001>
module attributes {stable_mosaic.version = 11 : i64} {
  func.func @mlp_srelu_kernel(%arg0: i32, %arg1: memref<24x128xf32, #tpu.memory_space<vmem>>, %arg2: memref<10x24xf32, #tpu.memory_space<vmem>>, %arg3: memref<10x5xf32, #tpu.memory_space<vmem>>, %arg4: memref<4x10xf32, #tpu.memory_space<vmem>>, %arg5: memref<4x5xf32, #tpu.memory_space<vmem>>, %arg6: memref<1x5xf32, #tpu.memory_space<vmem>>, %arg7: memref<1x128xf32, #tpu.memory_space<vmem>>) attributes {dimension_semantics = [#tpu.dimension_semantics<parallel>], iteration_bounds = array<i64: 1>, scalar_prefetch = 0 : i64, scratch_operands = 0 : i64, tpu.core_type = #tpu.core_type<tc>, window_params = [{transform_indices = @transform_0, window_bounds = array<i64: 24, 128>}, {pipeline_mode = #tpu.pipeline_mode<synchronous>, transform_indices = @transform_1, window_bounds = array<i64: 10, 24>}, {pipeline_mode = #tpu.pipeline_mode<synchronous>, transform_indices = @transform_2, window_bounds = array<i64: 10, 5>}, {pipeline_mode = #tpu.pipeline_mode<synchronous>, transform_indices = @transform_3, window_bounds = array<i64: 4, 10>}, {pipeline_mode = #tpu.pipeline_mode<synchronous>, transform_indices = @transform_4, window_bounds = array<i64: 4, 5>}, {pipeline_mode = #tpu.pipeline_mode<synchronous>, transform_indices = @transform_5, window_bounds = array<i64: 1, 5>}, {transform_indices = @transform_6, window_bounds = array<i64: 1, 128>}]} {
    %c0 = arith.constant 0 : index
    %c0_0 = arith.constant 0 : index
    %0 = vector.load %arg1[%c0, %c0_0] : memref<24x128xf32, #tpu.memory_space<vmem>>, vector<24x128xf32>
    %c0_1 = arith.constant 0 : index
    %c0_2 = arith.constant 0 : index
    %1 = vector.load %arg2[%c0_1, %c0_2] : memref<10x24xf32, #tpu.memory_space<vmem>>, vector<10x24xf32>
    %c0_3 = arith.constant 0 : index
    %c0_4 = arith.constant 0 : index
    %2 = vector.load %arg3[%c0_3, %c0_4] : memref<10x5xf32, #tpu.memory_space<vmem>>, vector<10x5xf32>
    %c0_5 = arith.constant 0 : index
    %c0_6 = arith.constant 0 : index
    %3 = vector.load %arg4[%c0_5, %c0_6] : memref<4x10xf32, #tpu.memory_space<vmem>>, vector<4x10xf32>
    %c0_7 = arith.constant 0 : index
    %c0_8 = arith.constant 0 : index
    %4 = vector.load %arg5[%c0_7, %c0_8] : memref<4x5xf32, #tpu.memory_space<vmem>>, vector<4x5xf32>
    %c0_9 = arith.constant 0 : index
    %c0_10 = arith.constant 0 : index
    %5 = vector.load %arg6[%c0_9, %c0_10] : memref<1x5xf32, #tpu.memory_space<vmem>>, vector<1x5xf32>
    %cst = arith.constant dense<0.000000e+00> : vector<10x128xf32>
    %6 = tpu.matmul %1, %0, %cst {dimension_numbers = #tpu.dot_dimension_numbers<[1], [0], [0], [1], [0, 0, 1, 1], [], []>} : vector<10x24xf32>, vector<24x128xf32>, vector<10x128xf32> -> vector<10x128xf32>
    %7 = vector.extract_strided_slice %2 {offsets = [0, 0], sizes = [10, 1], strides = [1, 1]} : vector<10x5xf32> to vector<10x1xf32>
    %8 = vector.broadcast %7 : vector<10x1xf32> to vector<10x128xf32>
    %9 = arith.addf %6, %8 : vector<10x128xf32>
    %10 = vector.extract_strided_slice %2 {offsets = [0, 1], sizes = [10, 1], strides = [1, 1]} : vector<10x5xf32> to vector<10x1xf32>
    %11 = vector.extract_strided_slice %2 {offsets = [0, 2], sizes = [10, 1], strides = [1, 1]} : vector<10x5xf32> to vector<10x1xf32>
    %12 = vector.extract_strided_slice %2 {offsets = [0, 3], sizes = [10, 1], strides = [1, 1]} : vector<10x5xf32> to vector<10x1xf32>
    %13 = vector.extract_strided_slice %2 {offsets = [0, 4], sizes = [10, 1], strides = [1, 1]} : vector<10x5xf32> to vector<10x1xf32>
    %14 = vector.broadcast %12 : vector<10x1xf32> to vector<10x128xf32>
    %15 = arith.cmpf oge, %9, %14 : vector<10x128xf32>
    %16 = vector.broadcast %12 : vector<10x1xf32> to vector<10x128xf32>
    %17 = arith.subf %9, %16 : vector<10x128xf32>
    %18 = vector.broadcast %13 : vector<10x1xf32> to vector<10x128xf32>
    %19 = arith.mulf %18, %17 : vector<10x128xf32>
    %20 = vector.broadcast %12 : vector<10x1xf32> to vector<10x128xf32>
    %21 = arith.addf %20, %19 : vector<10x128xf32>
    %22 = vector.broadcast %10 : vector<10x1xf32> to vector<10x128xf32>
    %23 = arith.cmpf ole, %9, %22 : vector<10x128xf32>
    %24 = vector.broadcast %10 : vector<10x1xf32> to vector<10x128xf32>
    %25 = arith.subf %9, %24 : vector<10x128xf32>
    %26 = vector.broadcast %11 : vector<10x1xf32> to vector<10x128xf32>
    %27 = arith.mulf %26, %25 : vector<10x128xf32>
    %28 = vector.broadcast %10 : vector<10x1xf32> to vector<10x128xf32>
    %29 = arith.addf %28, %27 : vector<10x128xf32>
    %30 = arith.select %23, %29, %9 : vector<10x128xi1>, vector<10x128xf32>
    %31 = arith.select %15, %21, %30 : vector<10x128xi1>, vector<10x128xf32>
    %32 = vector.extract_strided_slice %3 {offsets = [0, 0], sizes = [4, 1], strides = [1, 1]} : vector<4x10xf32> to vector<4x1xf32>
    %33 = vector.extract_strided_slice %31 {offsets = [0, 0], sizes = [1, 128], strides = [1, 1]} : vector<10x128xf32> to vector<1x128xf32>
    %34 = vector.broadcast %32 : vector<4x1xf32> to vector<4x128xf32>
    %35 = vector.broadcast %33 : vector<1x128xf32> to vector<4x128xf32>
    %36 = arith.mulf %34, %35 : vector<4x128xf32>
    %37 = vector.extract_strided_slice %4 {offsets = [0, 0], sizes = [4, 1], strides = [1, 1]} : vector<4x5xf32> to vector<4x1xf32>
    %38 = vector.broadcast %37 : vector<4x1xf32> to vector<4x128xf32>
    %39 = arith.addf %36, %38 : vector<4x128xf32>
    %40 = vector.extract_strided_slice %3 {offsets = [0, 1], sizes = [4, 1], strides = [1, 1]} : vector<4x10xf32> to vector<4x1xf32>
    %41 = vector.extract_strided_slice %31 {offsets = [1, 0], sizes = [1, 128], strides = [1, 1]} : vector<10x128xf32> to vector<1x128xf32>
    %42 = vector.broadcast %40 : vector<4x1xf32> to vector<4x128xf32>
    %43 = vector.broadcast %41 : vector<1x128xf32> to vector<4x128xf32>
    %44 = arith.mulf %42, %43 : vector<4x128xf32>
    %45 = arith.addf %39, %44 : vector<4x128xf32>
    %46 = vector.extract_strided_slice %3 {offsets = [0, 2], sizes = [4, 1], strides = [1, 1]} : vector<4x10xf32> to vector<4x1xf32>
    %47 = vector.extract_strided_slice %31 {offsets = [2, 0], sizes = [1, 128], strides = [1, 1]} : vector<10x128xf32> to vector<1x128xf32>
    %48 = vector.broadcast %46 : vector<4x1xf32> to vector<4x128xf32>
    %49 = vector.broadcast %47 : vector<1x128xf32> to vector<4x128xf32>
    %50 = arith.mulf %48, %49 : vector<4x128xf32>
    %51 = arith.addf %45, %50 : vector<4x128xf32>
    %52 = vector.extract_strided_slice %3 {offsets = [0, 3], sizes = [4, 1], strides = [1, 1]} : vector<4x10xf32> to vector<4x1xf32>
    %53 = vector.extract_strided_slice %31 {offsets = [3, 0], sizes = [1, 128], strides = [1, 1]} : vector<10x128xf32> to vector<1x128xf32>
    %54 = vector.broadcast %52 : vector<4x1xf32> to vector<4x128xf32>
    %55 = vector.broadcast %53 : vector<1x128xf32> to vector<4x128xf32>
    %56 = arith.mulf %54, %55 : vector<4x128xf32>
    %57 = arith.addf %51, %56 : vector<4x128xf32>
    %58 = vector.extract_strided_slice %3 {offsets = [0, 4], sizes = [4, 1], strides = [1, 1]} : vector<4x10xf32> to vector<4x1xf32>
    %59 = vector.extract_strided_slice %31 {offsets = [4, 0], sizes = [1, 128], strides = [1, 1]} : vector<10x128xf32> to vector<1x128xf32>
    %60 = vector.broadcast %58 : vector<4x1xf32> to vector<4x128xf32>
    %61 = vector.broadcast %59 : vector<1x128xf32> to vector<4x128xf32>
    %62 = arith.mulf %60, %61 : vector<4x128xf32>
    %63 = arith.addf %57, %62 : vector<4x128xf32>
    %64 = vector.extract_strided_slice %3 {offsets = [0, 5], sizes = [4, 1], strides = [1, 1]} : vector<4x10xf32> to vector<4x1xf32>
    %65 = vector.extract_strided_slice %31 {offsets = [5, 0], sizes = [1, 128], strides = [1, 1]} : vector<10x128xf32> to vector<1x128xf32>
    %66 = vector.broadcast %64 : vector<4x1xf32> to vector<4x128xf32>
    %67 = vector.broadcast %65 : vector<1x128xf32> to vector<4x128xf32>
    %68 = arith.mulf %66, %67 : vector<4x128xf32>
    %69 = arith.addf %63, %68 : vector<4x128xf32>
    %70 = vector.extract_strided_slice %3 {offsets = [0, 6], sizes = [4, 1], strides = [1, 1]} : vector<4x10xf32> to vector<4x1xf32>
    %71 = vector.extract_strided_slice %31 {offsets = [6, 0], sizes = [1, 128], strides = [1, 1]} : vector<10x128xf32> to vector<1x128xf32>
    %72 = vector.broadcast %70 : vector<4x1xf32> to vector<4x128xf32>
    %73 = vector.broadcast %71 : vector<1x128xf32> to vector<4x128xf32>
    %74 = arith.mulf %72, %73 : vector<4x128xf32>
    %75 = arith.addf %69, %74 : vector<4x128xf32>
    %76 = vector.extract_strided_slice %3 {offsets = [0, 7], sizes = [4, 1], strides = [1, 1]} : vector<4x10xf32> to vector<4x1xf32>
    %77 = vector.extract_strided_slice %31 {offsets = [7, 0], sizes = [1, 128], strides = [1, 1]} : vector<10x128xf32> to vector<1x128xf32>
    %78 = vector.broadcast %76 : vector<4x1xf32> to vector<4x128xf32>
    %79 = vector.broadcast %77 : vector<1x128xf32> to vector<4x128xf32>
    %80 = arith.mulf %78, %79 : vector<4x128xf32>
    %81 = arith.addf %75, %80 : vector<4x128xf32>
    %82 = vector.extract_strided_slice %3 {offsets = [0, 8], sizes = [4, 1], strides = [1, 1]} : vector<4x10xf32> to vector<4x1xf32>
    %83 = vector.extract_strided_slice %31 {offsets = [8, 0], sizes = [1, 128], strides = [1, 1]} : vector<10x128xf32> to vector<1x128xf32>
    %84 = vector.broadcast %82 : vector<4x1xf32> to vector<4x128xf32>
    %85 = vector.broadcast %83 : vector<1x128xf32> to vector<4x128xf32>
    %86 = arith.mulf %84, %85 : vector<4x128xf32>
    %87 = arith.addf %81, %86 : vector<4x128xf32>
    %88 = vector.extract_strided_slice %3 {offsets = [0, 9], sizes = [4, 1], strides = [1, 1]} : vector<4x10xf32> to vector<4x1xf32>
    %89 = vector.extract_strided_slice %31 {offsets = [9, 0], sizes = [1, 128], strides = [1, 1]} : vector<10x128xf32> to vector<1x128xf32>
    %90 = vector.broadcast %88 : vector<4x1xf32> to vector<4x128xf32>
    %91 = vector.broadcast %89 : vector<1x128xf32> to vector<4x128xf32>
    %92 = arith.mulf %90, %91 : vector<4x128xf32>
    %93 = arith.addf %87, %92 : vector<4x128xf32>
    %94 = vector.extract_strided_slice %4 {offsets = [0, 1], sizes = [4, 1], strides = [1, 1]} : vector<4x5xf32> to vector<4x1xf32>
    %95 = vector.extract_strided_slice %4 {offsets = [0, 2], sizes = [4, 1], strides = [1, 1]} : vector<4x5xf32> to vector<4x1xf32>
    %96 = vector.extract_strided_slice %4 {offsets = [0, 3], sizes = [4, 1], strides = [1, 1]} : vector<4x5xf32> to vector<4x1xf32>
    %97 = vector.extract_strided_slice %4 {offsets = [0, 4], sizes = [4, 1], strides = [1, 1]} : vector<4x5xf32> to vector<4x1xf32>
    %98 = vector.broadcast %96 : vector<4x1xf32> to vector<4x128xf32>
    %99 = arith.cmpf oge, %93, %98 : vector<4x128xf32>
    %100 = vector.broadcast %96 : vector<4x1xf32> to vector<4x128xf32>
    %101 = arith.subf %93, %100 : vector<4x128xf32>
    %102 = vector.broadcast %97 : vector<4x1xf32> to vector<4x128xf32>
    %103 = arith.mulf %102, %101 : vector<4x128xf32>
    %104 = vector.broadcast %96 : vector<4x1xf32> to vector<4x128xf32>
    %105 = arith.addf %104, %103 : vector<4x128xf32>
    %106 = vector.broadcast %94 : vector<4x1xf32> to vector<4x128xf32>
    %107 = arith.cmpf ole, %93, %106 : vector<4x128xf32>
    %108 = vector.broadcast %94 : vector<4x1xf32> to vector<4x128xf32>
    %109 = arith.subf %93, %108 : vector<4x128xf32>
    %110 = vector.broadcast %95 : vector<4x1xf32> to vector<4x128xf32>
    %111 = arith.mulf %110, %109 : vector<4x128xf32>
    %112 = vector.broadcast %94 : vector<4x1xf32> to vector<4x128xf32>
    %113 = arith.addf %112, %111 : vector<4x128xf32>
    %114 = arith.select %107, %113, %93 : vector<4x128xi1>, vector<4x128xf32>
    %115 = arith.select %99, %105, %114 : vector<4x128xi1>, vector<4x128xf32>
    %116 = vector.extract_strided_slice %5 {offsets = [0, 0], sizes = [1, 1], strides = [1, 1]} : vector<1x5xf32> to vector<1x1xf32>
    %117 = vector.extract_strided_slice %115 {offsets = [0, 0], sizes = [1, 128], strides = [1, 1]} : vector<4x128xf32> to vector<1x128xf32>
    %118 = vector.broadcast %116 : vector<1x1xf32> to vector<1x128xf32>
    %119 = arith.mulf %118, %117 : vector<1x128xf32>
    %120 = vector.extract_strided_slice %5 {offsets = [0, 4], sizes = [1, 1], strides = [1, 1]} : vector<1x5xf32> to vector<1x1xf32>
    %121 = vector.broadcast %120 : vector<1x1xf32> to vector<1x128xf32>
    %122 = arith.addf %119, %121 : vector<1x128xf32>
    %123 = vector.extract_strided_slice %5 {offsets = [0, 1], sizes = [1, 1], strides = [1, 1]} : vector<1x5xf32> to vector<1x1xf32>
    %124 = vector.extract_strided_slice %115 {offsets = [1, 0], sizes = [1, 128], strides = [1, 1]} : vector<4x128xf32> to vector<1x128xf32>
    %125 = vector.broadcast %123 : vector<1x1xf32> to vector<1x128xf32>
    %126 = arith.mulf %125, %124 : vector<1x128xf32>
    %127 = arith.addf %122, %126 : vector<1x128xf32>
    %128 = vector.extract_strided_slice %5 {offsets = [0, 2], sizes = [1, 1], strides = [1, 1]} : vector<1x5xf32> to vector<1x1xf32>
    %129 = vector.extract_strided_slice %115 {offsets = [2, 0], sizes = [1, 128], strides = [1, 1]} : vector<4x128xf32> to vector<1x128xf32>
    %130 = vector.broadcast %128 : vector<1x1xf32> to vector<1x128xf32>
    %131 = arith.mulf %130, %129 : vector<1x128xf32>
    %132 = arith.addf %127, %131 : vector<1x128xf32>
    %133 = vector.extract_strided_slice %5 {offsets = [0, 3], sizes = [1, 1], strides = [1, 1]} : vector<1x5xf32> to vector<1x1xf32>
    %134 = vector.extract_strided_slice %115 {offsets = [3, 0], sizes = [1, 128], strides = [1, 1]} : vector<4x128xf32> to vector<1x128xf32>
    %135 = vector.broadcast %133 : vector<1x1xf32> to vector<1x128xf32>
    %136 = arith.mulf %135, %134 : vector<1x128xf32>
    %137 = arith.addf %132, %136 : vector<1x128xf32>
    %c0_11 = arith.constant 0 : index
    %c0_12 = arith.constant 0 : index
    %138 = vector.load %arg7[%c0_11, %c0_12] : memref<1x128xf32, #tpu.memory_space<vmem>>, vector<1x128xf32>
    tpu.vector_store %arg7[%c0_11, %c0_12], %137 {strides = array<i32>} : memref<1x128xf32, #tpu.memory_space<vmem>>, vector<1x128xf32>,
    return
  }
  func.func @transform_0(%arg0: i32) -> (i32, i32) {
    %c0_i32 = arith.constant 0 : i32
    %c0_i32_0 = arith.constant 0 : i32
    return %c0_i32, %arg0 : i32, i32
  }
  func.func @transform_1(%arg0: i32) -> (i32, i32) {
    %c0_i32 = arith.constant 0 : i32
    %c0_i32_0 = arith.constant 0 : i32
    %c0_i32_1 = arith.constant 0 : i32
    return %c0_i32, %c0_i32_0 : i32, i32
  }
  func.func @transform_2(%arg0: i32) -> (i32, i32) {
    %c0_i32 = arith.constant 0 : i32
    %c0_i32_0 = arith.constant 0 : i32
    %c0_i32_1 = arith.constant 0 : i32
    return %c0_i32, %c0_i32_0 : i32, i32
  }
  func.func @transform_3(%arg0: i32) -> (i32, i32) {
    %c0_i32 = arith.constant 0 : i32
    %c0_i32_0 = arith.constant 0 : i32
    %c0_i32_1 = arith.constant 0 : i32
    return %c0_i32, %c0_i32_0 : i32, i32
  }
  func.func @transform_4(%arg0: i32) -> (i32, i32) {
    %c0_i32 = arith.constant 0 : i32
    %c0_i32_0 = arith.constant 0 : i32
    %c0_i32_1 = arith.constant 0 : i32
    return %c0_i32, %c0_i32_0 : i32, i32
  }
  func.func @transform_5(%arg0: i32) -> (i32, i32) {
    %c0_i32 = arith.constant 0 : i32
    %c0_i32_0 = arith.constant 0 : i32
    %c0_i32_1 = arith.constant 0 : i32
    return %c0_i32, %c0_i32_0 : i32, i32
  }
  func.func @transform_6(%arg0: i32) -> (i32, i32) {
    %c0_i32 = arith.constant 0 : i32
    %c0_i32_0 = arith.constant 0 : i32
    return %c0_i32, %arg0 : i32, i32
  }
}

</mosaic_0001>

<llo_original>
// kernel: tpu_custom_call.1
$region0: #{tpu_custom_call.1}
  #allocation0 [shape = 'u32[]', space=smem, size = 0x4, offset = 0x4, fixed_abs, tag = 'smem constant byte address 0x4 - core index']
  #allocation1 [shape = 'u32[144,128]{1,0:T(1,128)}', space=vmem, size = 0x12000, scoped, tag = 'internal scratch']
  %s0 = inlined_call_operand.vmem [shape: f32[24,128], index: 0, kind: input, shape index: {}]
  %s1 = inlined_call_operand.hbm [shape: f32[10,24], index: 1, kind: input, shape index: {}]
  %s2 = inlined_call_operand.vmem [shape: f32[10,5], index: 2, kind: input, shape index: {}]
  %s3 = inlined_call_operand.vmem [shape: f32[4,10], index: 3, kind: input, shape index: {}]
  %s4 = inlined_call_operand.vmem [shape: f32[4,5], index: 4, kind: input, shape index: {}]
  %s5 = inlined_call_operand.vmem [shape: f32[1,5], index: 5, kind: input, shape index: {}]
  %s6 = inlined_call_operand.hbm [shape: f32[1,128], index: 6, kind: output, shape index: {}]
  %s7 = sld [smem:[#allocation0]]
  $region38: #{tpu_custom_call.1} parent=0
    _
  %s9 = ssub.s32 1, %s7
  %s10 = scalar_select 0, %s9, %s7
  $region1: #{tpu_custom_call.1} parent=0
    #allocation2 [shape = 'u8[8192]{0}', space=vmem, size = 0x2000, scoped, tag = 'input window, operand 1, single buffered']
    #allocation3 [shape = 's32[1]{0}', space=sflag, size = 0x4, scoped, tag = 'scoped memory for tpu_custom_call.1']
    #allocation4 [shape = 's32[1]{0}', space=sflag, size = 0x4, scoped, tag = 'scoped memory for tpu_custom_call.1']
    #allocation5 [shape = 'u8[512]{0}', space=vmem, size = 0x400, scoped, tag = 'output window, operand 0, single buffered']
    %11 = vsyncpa [#allocation3], 0
    %12 = vsyncpa [#allocation4], 0
    // Predicated region
    $region2: #{tpu_custom_call.1} parent=1 // pred_check
      _
    $region3: #{tpu_custom_call.1} parent=1 // pred_check_branch
      %14 = sbr.rel (0) target = $region5
    $region4: #{tpu_custom_call.1} parent=1 // pred_region
      _
    $region5: #{tpu_custom_call.1} parent=1 // pred_fallthru
      _
    // Predicated region
    $region6: #{tpu_custom_call.1} parent=1 // pred_check
      _
    $region7: #{tpu_custom_call.1} parent=1 // pred_check_branch
      %16 = sbr.rel (0) target = $region9
    $region8: #{tpu_custom_call.1} parent=1 // pred_region
      %s18 = ssub.s32 256, 256
      %19 = vsyncadd [#allocation3], %s18
      %s20 = sshll.u32 [#allocation2], 4
      %s21 = int_to_ptr.vmem [resolvable:$true] %s20
      %26 = dma.hbm_to_vmem [thread:$0]  %s1, 256, %s21, [#allocation3], 128, 128, 8
    $region9: #{tpu_custom_call.1} parent=1 // pred_fallthru
      _
    // Predicated region
    $region10: #{tpu_custom_call.1} parent=1 // pred_check
      _
    $region11: #{tpu_custom_call.1} parent=1 // pred_check_branch
      %28 = sbr.rel (0) target = $region13
    $region12: #{tpu_custom_call.1} parent=1 // pred_region
      _
    $region13: #{tpu_custom_call.1} parent=1 // pred_fallthru
      _
    // Predicated region
    $region14: #{tpu_custom_call.1} parent=1 // pred_check
      _
    $region15: #{tpu_custom_call.1} parent=1 // pred_check_branch
      %30 = sbr.rel (0) target = $region17
    $region16: #{tpu_custom_call.1} parent=1 // pred_region
      _
    $region17: #{tpu_custom_call.1} parent=1 // pred_fallthru
      _
    // Predicated region
    $region18: #{tpu_custom_call.1} parent=1 // pred_check
      _
    $region19: #{tpu_custom_call.1} parent=1 // pred_check_branch
      %32 = sbr.rel (0) target = $region21
    $region20: #{tpu_custom_call.1} parent=1 // pred_region
      _
    $region21: #{tpu_custom_call.1} parent=1 // pred_fallthru
      _
    // Predicated region
    $region22: #{tpu_custom_call.1} parent=1 // pred_check
      _
    $region23: #{tpu_custom_call.1} parent=1 // pred_check_branch
      %34 = sbr.rel (0) target = $region25
    $region24: #{tpu_custom_call.1} parent=1 // pred_region
      _
    $region25: #{tpu_custom_call.1} parent=1 // pred_fallthru
      _
    // Predicated region
    $region26: #{tpu_custom_call.1} parent=1 // pred_check
      _
    $region27: #{tpu_custom_call.1} parent=1 // pred_check_branch
      %36 = sbr.rel (0) target = $region29
    $region28: #{tpu_custom_call.1} parent=1 // pred_region
      %37 = dma.done [#allocation3], 256
    $region29: #{tpu_custom_call.1} parent=1 // pred_fallthru
      _
    %v38 = vld [vmem:[%s0] sm:$0xff]
    %v39 = vld [vmem:[%s0 + $0x8] sm:$0xff]
    %v40 = vld [vmem:[%s0 + $0x10] sm:$0xff]
    %v41 = vld [vmem:[#allocation2] sm:$0xff]
    %v42 = vld [vmem:[#allocation2 + $0x8] sm:$0x3]
    %v43 = vld [vmem:[%s2] sm:$0xff]
    %v44 = vld [vmem:[%s2 + $0x8] sm:$0x3]
    %v45 = vld [vmem:[%s3] sm:$0xf]
    %v46 = vld [vmem:[%s4] sm:$0xf]
    %v47 = vld [vmem:[%s5] sm:$0x1]
    %49 = vset.pattern.permute.xlu0 0
    %50 = vperm.xlu0 %49, %v43
    %v51 = vpop.permute.xlu0 %50
    %54 = vset.pattern.permute.xlu0 0
    %55 = vperm.xlu0 %54, %v44
    %v56 = vpop.permute.xlu0 %55
    %vm58 = vcmask 195584
    %v60 = vsel %vm58, %v41, 0
    %v63 = vsel %vm58, %v42, 0
    %65 = vmatprep.subr.mxu0 0.0
    %66 = vmatpush1.msra.mxu0 %v38
    %67 = vmatprep.subr.mxu0 0.0
    %68 = vmatpush1.msra.mxu0 %v39
    %69 = vmatprep.subr.mxu0 0.0
    %70 = vmatpush1.msra.mxu0 %v40
    %71 = vmatprep.subr.mxu0 0.0
    %72 = vmatpush1.msra.mxu0 0.0
    %73 = vmatprep.subr.mxu0 0.0
    %74 = vmatpush1.msra.mxu0 0.0
    %75 = vmatprep.subr.mxu0 0.0
    %76 = vmatpush1.msra.mxu0 0.0
    %77 = vmatprep.subr.mxu0 0.0
    %78 = vmatpush1.msra.mxu0 0.0
    %79 = vmatprep.subr.mxu0 0.0
    %80 = vmatpush1.msra.mxu0 0.0
    %81 = vmatprep.subr.mxu0 0.0
    %82 = vmatpush1.msra.mxu0 0.0
    %83 = vmatprep.subr.mxu0 0.0
    %84 = vmatpush1.msra.mxu0 0.0
    %85 = vmatprep.subr.mxu0 0.0
    %86 = vmatpush1.msra.mxu0 0.0
    %87 = vmatprep.subr.mxu0 0.0
    %88 = vmatpush1.msra.mxu0 0.0
    %89 = vmatprep.subr.mxu0 0.0
    %90 = vmatpush1.msra.mxu0 0.0
    %91 = vmatprep.subr.mxu0 0.0
    %92 = vmatpush1.msra.mxu0 0.0
    %93 = vmatprep.subr.mxu0 0.0
    %94 = vmatpush1.msra.mxu0 0.0
    %95 = vmatprep.subr.mxu0 0.0
    %96 = vmatpush1.msra.mxu0 0.0
    %97 = vmatprep.subr.mxu0 0.0
    %98 = vmatpush1.msra.mxu0 0.0
    %99 = vmatprep.subr.mxu0 0.0
    %100 = vmatpush1.msra.mxu0 0.0
    %101 = vmatprep.subr.mxu0 0.0
    %102 = vmatpush1.msra.mxu0 0.0
    %103 = vmatprep.subr.mxu0 0.0
    %104 = vmatpush1.msra.mxu0 0.0
    %105 = vmatprep.subr.mxu0 0.0
    %106 = vmatpush1.msra.mxu0 0.0
    %107 = vmatprep.subr.mxu0 0.0
    %108 = vmatpush1.msra.mxu0 0.0
    %109 = vmatprep.subr.mxu0 0.0
    %110 = vmatpush1.msra.mxu0 0.0
    %111 = vmatprep.subr.mxu0 0.0
    %112 = vmatpush1.msra.mxu0 0.0
    %113 = vmatprep.subr.mxu0 0.0
    %114 = vmatpush1.msra.mxu0 0.0
    %115 = vmatprep.subr.mxu0 0.0
    %116 = vmatpush1.msra.mxu0 0.0
    %117 = vmatprep.subr.mxu0 0.0
    %118 = vmatpush1.msra.mxu0 0.0
    %119 = vmatprep.subr.mxu0 0.0
    %120 = vmatpush1.msra.mxu0 0.0
    %121 = vmatprep.subr.mxu0 0.0
    %122 = vmatpush1.msra.mxu0 0.0
    %123 = vmatprep.subr.mxu0 0.0
    %124 = vmatpush1.msra.mxu0 0.0
    %125 = vmatprep.subr.mxu0 0.0
    %126 = vmatpush1.msra.mxu0 0.0
    %127 = vmatprep.subr.mxu0 0.0
    %128 = vmatpush1.msra.mxu0 0.0
    %129 = vmatprep.mubr.f32.mxu0 0.0
    %130 = vmatmul.mubr.f32.gmra.mrb[0].mxu0 %v60
    %v131 = vpop.f32.mrb[0].mxu0
    %v132 = vadd.f32 %v51, %v131
    %v133 = vpop.f32.mrb[0].mxu0
    %134 = vmatprep.mubr.f32.mxu0 0.0
    %135 = vmatmul.mubr.f32.gmra.mrb[0].mxu0 %v63
    %v136 = vpop.f32.mrb[0].mxu0
    %v137 = vadd.f32 %v56, %v136
    %v138 = vpop.f32.mrb[0].mxu0
    %139 = vdwg.mxu0
    %140 = vset.pattern.permute.xlu0 3
    %141 = vperm.xlu0 %140, %v43
    %v142 = vpop.permute.xlu0 %141
    %144 = vset.pattern.permute.xlu0 3
    %145 = vperm.xlu0 %144, %v44
    %v146 = vpop.permute.xlu0 %145
    %vm148 = vcmp.ge.f32.partialorder %v132, %v142
    %vm149 = vcmp.ge.f32.partialorder %v137, %v146
    %v150 = vsub.f32 %v132, %v142
    %v151 = vsub.f32 %v137, %v146
    %152 = vset.pattern.permute.xlu0 4
    %153 = vperm.xlu0 %152, %v43
    %v154 = vpop.permute.xlu0 %153
    %156 = vset.pattern.permute.xlu0 4
    %157 = vperm.xlu0 %156, %v44
    %v158 = vpop.permute.xlu0 %157
    %v160 = vmul.f32 %v154, %v150
    %v161 = vmul.f32 %v158, %v151
    %v162 = vadd.f32 %v142, %v160
    %v163 = vadd.f32 %v146, %v161
    %164 = vset.pattern.permute.xlu0 1
    %165 = vperm.xlu0 %164, %v43
    %v166 = vpop.permute.xlu0 %165
    %168 = vset.pattern.permute.xlu0 1
    %169 = vperm.xlu0 %168, %v44
    %v170 = vpop.permute.xlu0 %169
    %vm172 = vcmp.le.f32.partialorder %v132, %v166
    %vm173 = vcmp.le.f32.partialorder %v137, %v170
    %v174 = vsub.f32 %v132, %v166
    %v175 = vsub.f32 %v137, %v170
    %176 = vset.pattern.permute.xlu0 2
    %177 = vperm.xlu0 %176, %v43
    %v178 = vpop.permute.xlu0 %177
    %180 = vset.pattern.permute.xlu0 2
    %181 = vperm.xlu0 %180, %v44
    %v182 = vpop.permute.xlu0 %181
    %v184 = vmul.f32 %v178, %v174
    %v185 = vmul.f32 %v182, %v175
    %v186 = vadd.f32 %v166, %v184
    %v187 = vadd.f32 %v170, %v185
    %v188 = vsel %vm172, %v186, %v132
    %v189 = vsel %vm173, %v187, %v137
    %v190 = vsel %vm148, %v162, %v188
    %v191 = vsel %vm149, %v163, %v189
    %193 = vset.pattern.permute.xlu0 0
    %194 = vperm.xlu0 %193, %v45
    %v195 = vpop.permute.xlu0 %194
    %v197 = vlaneseq
    %v198 = vshrl.u32 %v197, 7
    %v199 = vsub.s32 0, %v198
    %v200 = vrot.slane %v190, %v199
    %v201 = vmul.f32 %v195, %v200
    %203 = vset.pattern.permute.xlu0 0
    %204 = vperm.xlu0 %203, %v46
    %v205 = vpop.permute.xlu0 %204
    %v207 = vadd.f32 %v201, %v205
    %208 = vset.pattern.permute.xlu0 1
    %209 = vperm.xlu0 %208, %v45
    %v210 = vpop.permute.xlu0 %209
    %v212 = vlaneseq
    %v213 = vshrl.u32 %v212, 7
    %v214 = vsub.s32 1, %v213
    %v215 = vrot.slane %v190, %v214
    %v216 = vmul.f32 %v210, %v215
    %v217 = vadd.f32 %v207, %v216
    %218 = vset.pattern.permute.xlu0 2
    %219 = vperm.xlu0 %218, %v45
    %v220 = vpop.permute.xlu0 %219
    %v222 = vlaneseq
    %v223 = vshrl.u32 %v222, 7
    %v224 = vsub.s32 2, %v223
    %v225 = vrot.slane %v190, %v224
    %v226 = vmul.f32 %v220, %v225
    %v227 = vadd.f32 %v217, %v226
    %228 = vset.pattern.permute.xlu0 3
    %229 = vperm.xlu0 %228, %v45
    %v230 = vpop.permute.xlu0 %229
    %v232 = vlaneseq
    %v233 = vshrl.u32 %v232, 7
    %v234 = vsub.s32 3, %v233
    %v235 = vrot.slane %v190, %v234
    %v236 = vmul.f32 %v230, %v235
    %v237 = vadd.f32 %v227, %v236
    %238 = vset.pattern.permute.xlu0 4
    %239 = vperm.xlu0 %238, %v45
    %v240 = vpop.permute.xlu0 %239
    %v242 = vlaneseq
    %v243 = vshrl.u32 %v242, 7
    %v244 = vsub.s32 4, %v243
    %v245 = vrot.slane %v190, %v244
    %v246 = vmul.f32 %v240, %v245
    %v247 = vadd.f32 %v237, %v246
    %248 = vset.pattern.permute.xlu0 5
    %249 = vperm.xlu0 %248, %v45
    %v250 = vpop.permute.xlu0 %249
    %v252 = vlaneseq
    %v253 = vshrl.u32 %v252, 7
    %v254 = vsub.s32 5, %v253
    %v255 = vrot.slane %v190, %v254
    %v256 = vmul.f32 %v250, %v255
    %v257 = vadd.f32 %v247, %v256
    %258 = vset.pattern.permute.xlu0 6
    %259 = vperm.xlu0 %258, %v45
    %v260 = vpop.permute.xlu0 %259
    %v262 = vlaneseq
    %v263 = vshrl.u32 %v262, 7
    %v264 = vsub.s32 6, %v263
    %v265 = vrot.slane %v190, %v264
    %v266 = vmul.f32 %v260, %v265
    %v267 = vadd.f32 %v257, %v266
    %268 = vset.pattern.permute.xlu0 7
    %269 = vperm.xlu0 %268, %v45
    %v270 = vpop.permute.xlu0 %269
    %v272 = vlaneseq
    %v273 = vshrl.u32 %v272, 7
    %v274 = vsub.s32 7, %v273
    %v275 = vrot.slane %v190, %v274
    %v276 = vmul.f32 %v270, %v275
    %v277 = vadd.f32 %v267, %v276
    %278 = vset.pattern.permute.xlu0 8
    %279 = vperm.xlu0 %278, %v45
    %v280 = vpop.permute.xlu0 %279
    %v282 = vlaneseq
    %v283 = vshrl.u32 %v282, 7
    %v284 = vsub.s32 0, %v283
    %v285 = vrot.slane %v191, %v284
    %v286 = vmul.f32 %v280, %v285
    %v287 = vadd.f32 %v277, %v286
    %288 = vset.pattern.permute.xlu0 9
    %289 = vperm.xlu0 %288, %v45
    %v290 = vpop.permute.xlu0 %289
    %v292 = vlaneseq
    %v293 = vshrl.u32 %v292, 7
    %v294 = vsub.s32 1, %v293
    %v295 = vrot.slane %v191, %v294
    %v296 = vmul.f32 %v290, %v295
    %v297 = vadd.f32 %v287, %v296
    %298 = vset.pattern.permute.xlu0 3
    %299 = vperm.xlu0 %298, %v46
    %v300 = vpop.permute.xlu0 %299
    %vm302 = vcmp.ge.f32.partialorder %v297, %v300
    %v303 = vsub.f32 %v297, %v300
    %304 = vset.pattern.permute.xlu0 4
    %305 = vperm.xlu0 %304, %v46
    %v306 = vpop.permute.xlu0 %305
    %v308 = vmul.f32 %v306, %v303
    %v309 = vadd.f32 %v300, %v308
    %310 = vset.pattern.permute.xlu0 1
    %311 = vperm.xlu0 %310, %v46
    %v312 = vpop.permute.xlu0 %311
    %vm314 = vcmp.le.f32.partialorder %v297, %v312
    %v315 = vsub.f32 %v297, %v312
    %316 = vset.pattern.permute.xlu0 2
    %317 = vperm.xlu0 %316, %v46
    %v318 = vpop.permute.xlu0 %317
    %v320 = vmul.f32 %v318, %v315
    %v321 = vadd.f32 %v312, %v320
    %v322 = vsel %vm314, %v321, %v297
    %v323 = vsel %vm302, %v309, %v322
    %325 = vset.pattern.permute.xlu0 0
    %326 = vperm.xlu0 %325, %v47
    %v327 = vpop.permute.xlu0 %326
    %v329 = vlaneseq
    %v330 = vshrl.u32 %v329, 7
    %v331 = vsub.s32 0, %v330
    %v332 = vrot.slane %v327, %v331
    %v333 = vmul.f32 %v332, %v323
    %334 = vset.pattern.permute.xlu0 4
    %335 = vperm.xlu0 %334, %v47
    %v336 = vpop.permute.xlu0 %335
    %v338 = vlaneseq
    %v339 = vshrl.u32 %v338, 7
    %v340 = vsub.s32 0, %v339
    %v341 = vrot.slane %v336, %v340
    %v342 = vadd.f32 %v333, %v341
    %343 = vset.pattern.permute.xlu0 1
    %344 = vperm.xlu0 %343, %v47
    %v345 = vpop.permute.xlu0 %344
    %v347 = vlaneseq
    %v348 = vshrl.u32 %v347, 7
    %v349 = vsub.s32 0, %v348
    %v350 = vrot.slane %v345, %v349
    %v351 = vmul.f32 %v350, %v323
    %v353 = vrot.slane %v351, 1
    %v355 = vadd.f32 %v342, %v353
    %356 = vset.pattern.permute.xlu0 2
    %357 = vperm.xlu0 %356, %v47
    %v358 = vpop.permute.xlu0 %357
    %v360 = vlaneseq
    %v361 = vshrl.u32 %v360, 7
    %v362 = vsub.s32 0, %v361
    %v363 = vrot.slane %v358, %v362
    %v364 = vmul.f32 %v363, %v323
    %v366 = vrot.slane %v364, 2
    %v368 = vadd.f32 %v355, %v366
    %369 = vset.pattern.permute.xlu0 3
    %370 = vperm.xlu0 %369, %v47
    %v371 = vpop.permute.xlu0 %370
    %v373 = vlaneseq
    %v374 = vshrl.u32 %v373, 7
    %v375 = vsub.s32 0, %v374
    %v376 = vrot.slane %v371, %v375
    %v377 = vmul.f32 %v376, %v323
    %v379 = vrot.slane %v377, 3
    %v381 = vadd.f32 %v368, %v379
    %382 = vst [vmem:[#allocation5] sm:$0x1] %v381
    // Predicated region
    $region30: #{tpu_custom_call.1} parent=1 // pred_check
      _
    $region31: #{tpu_custom_call.1} parent=1 // pred_check_branch
      %384 = sbr.rel (0) target = $region33
    $region32: #{tpu_custom_call.1} parent=1 // pred_region
      %s386 = ssub.s32 16, 16
      %387 = vsyncadd [#allocation4], %s386
      %s389 = sshll.u32 [#allocation5], 4
      %s390 = int_to_ptr.vmem [resolvable:$true] %s389
      %392 = dma.vmem_to_hbm [thread:$0]  %s390, 16, %s6, [#allocation4]
    $region33: #{tpu_custom_call.1} parent=1 // pred_fallthru
      _
    // Predicated region
    $region34: #{tpu_custom_call.1} parent=1 // pred_check
      _
    $region35: #{tpu_custom_call.1} parent=1 // pred_check_branch
      %394 = sbr.rel (0) target = $region37
    $region36: #{tpu_custom_call.1} parent=1 // pred_region
      %395 = dma.done [#allocation4], 16
    $region37: #{tpu_custom_call.1} parent=1 // pred_fallthru
      _
    %396 = vsyncpa [#allocation3], 1
    %397 = vsyncpa [#allocation4], 1

</llo_original>
